<compile_context>
chip_gen: v5e
topology: v5e:2x2
jax: 0.10.0
libtpu: 0.0.40
codegen_flags: <defaults>
</compile_context>

<pallas_src>
import jax
import jax.numpy as jnp
from jax.experimental import pallas as pl
from jax.experimental.pallas import tpu as pltpu

EPS = 1e-5
_VMEM_LIMIT = 32 * 1024 * 1024       # well under v7x's 64 MiB per-TC VMEM
_TARGET_STEP_BYTES = 2 * 1024 * 1024  # ~2 MiB of HBM traffic per grid step


def _round_up(x, m):
    return ((x + m - 1) // m) * m


def _plan_tiles(hw, n, cin, cout, bytes_per_elem=4):
    """Pick (hw_pad, t_hw, n_t, nb): lane tile, #spatial tiles, batch block."""
    hw128 = _round_up(hw, 128)
    # elems of (Nb * t_hw) so that the per-step in+out traffic ~= target bytes
    target_elems = max(128, _TARGET_STEP_BYTES // (bytes_per_elem * (cin + cout)))
    t_cap = max(128, (min(target_elems, hw128) // 128) * 128)
    n_t = pl.cdiv(hw128, t_cap)
    t_hw = _round_up(pl.cdiv(hw128, n_t), 128)
    hw_pad = t_hw * n_t
    nb = max(1, min(n, target_elems // t_hw))
    while n % nb:          # keep Nb a divisor of N (no batch padding needed)
        nb -= 1
    return hw_pad, t_hw, n_t, nb


def _conv1x1_tile(x, w):
    """x: (Nb, Cin, T), w: (Cout, Cin) -> y: (Nb, Cout, T) in f32."""
    nb, cin, _ = x.shape
    xf = x.astype(jnp.float32)
    wf = w.astype(jnp.float32)
    if cin <= 16:
        # VPU form: Cin broadcast multiply-adds, lane-dense, no MXU, no transposes.
        acc = wf[None, :, 0:1] * xf[:, 0:1, :]
        for c in range(1, cin):
            acc = acc + wf[None, :, c:c + 1] * xf[:, c:c + 1, :]
        return acc
    # general fallback: per-batch MXU matmul (Nb is small by construction)
    return jnp.stack(
        [jnp.dot(wf, xf[i], preferred_element_type=jnp.float32) for i in range(nb)],
        axis=0)


# ---------------------------------------------------------------------------
# Pass 1: per-channel partial sum / sum-of-squares of y = w @ x
#         (accumulated over the spatial-tile axis; one partial per grid row)
# ---------------------------------------------------------------------------
def stats_kernel(x_ref, w_ref, sum_ref, sumsq_ref):
    # x_ref:     (Nb, Cin, tHW)   Nb batch elements, one spatial tile (NCHW-native)
    # w_ref:     (Cout, Cin)      1x1 conv weight
    # sum_ref:   (1, Cout, 1)     per-grid-row resident accumulator
    # sumsq_ref: (1, Cout, 1)     per-grid-row resident accumulator
    @pl.when(pl.program_id(1) == 0)
    def _init():
        sum_ref[...] = jnp.zeros_like(sum_ref)
        sumsq_ref[...] = jnp.zeros_like(sumsq_ref)

    y = _conv1x1_tile(x_ref[...], w_ref[...])                     # (Nb, Cout, tHW) f32
    sum_ref[...] += jnp.sum(jnp.sum(y, axis=2, keepdims=True), axis=0, keepdims=True)
    sumsq_ref[...] += jnp.sum(jnp.sum(y * y, axis=2, keepdims=True), axis=0,
                              keepdims=True)


# ---------------------------------------------------------------------------
# Pass 2: conv + folded-BN affine + ReLU  (lane-dense output, fully parallel)
# ---------------------------------------------------------------------------
def apply_kernel(x_ref, w_ref, ss_ref, o_ref):
    # x_ref:  (Nb, Cin, tHW)
    # w_ref:  (Cout, Cin)
    # ss_ref: (Cout, 2)   [:,0] = gamma*rsqrt(var+eps), [:,1] = beta - mean*scale
    # o_ref:  (Nb, Cout, tHW)
    y = _conv1x1_tile(x_ref[...], w_ref[...])                     # (Nb, Cout, tHW) f32
    ss = ss_ref[...]
    scale = ss[:, 0:1][None]                                      # (1, Cout, 1)
    shift = ss[:, 1:2][None]                                      # (1, Cout, 1)
    o_ref[...] = jnp.maximum(y * scale + shift, 0.0).astype(o_ref.dtype)


def conv_bn_relu(x_nchw, weight, gamma, beta, eps=EPS):
    """x_nchw: (N, Cin, H, W), weight: (Cout, Cin, 1, 1), gamma/beta: (Cout,)."""
    N, Cin, H, W = x_nchw.shape
    Cout = weight.shape[0]
    assert weight.shape[2] == 1 and weight.shape[3] == 1, "1x1 conv only"
    HW = H * W
    hw_pad, t_hw, n_t, nb = _plan_tiles(HW, N, Cin, Cout)
    ng = N // nb

    # glue: free reshape (no transposes); zero-pad HW only when not 128-aligned.
    x3 = x_nchw.reshape(N, Cin, HW)
    if hw_pad != HW:
        x3 = jnp.pad(x3, ((0, 0), (0, 0), (0, hw_pad - HW)))
    w = weight.reshape(Cout, Cin)

    # ---- pass 1: batch statistics of y = conv(x) (per-grid-row partials) ----
    sum_rows, sumsq_rows = pl.pallas_call(
        stats_kernel,
        grid=(ng, n_t),
        in_specs=[
            pl.BlockSpec((nb, Cin, t_hw), lambda n, t: (n, 0, t)),
            pl.BlockSpec((Cout, Cin), lambda n, t: (0, 0)),
        ],
        out_specs=[
            pl.BlockSpec((1, Cout, 1), lambda n, t: (n, 0, 0)),
            pl.BlockSpec((1, Cout, 1), lambda n, t: (n, 0, 0)),
        ],
        out_shape=[
            jax.ShapeDtypeStruct((ng, Cout, 1), jnp.float32),
            jax.ShapeDtypeStruct((ng, Cout, 1), jnp.float32),
        ],
        compiler_params=pltpu.CompilerParams(
            dimension_semantics=("parallel", "arbitrary"),
            vmem_limit_bytes=_VMEM_LIMIT,
        ),
    )(x3, w)

    # ---- glue: fold BN (training-mode batch stats) into per-channel affine ----
    count = jnp.float32(N * HW)                     # true count (padding added zeros)
    sum_y = jnp.sum(sum_rows, axis=0)               # (Cout, 1)
    sumsq_y = jnp.sum(sumsq_rows, axis=0)           # (Cout, 1)
    mean = sum_y / count
    var = jnp.maximum(sumsq_y / count - mean * mean, 0.0)   # biased variance
    inv_std = jax.lax.rsqrt(var + eps)
    scale = gamma.reshape(Cout, 1).astype(jnp.float32) * inv_std
    shift = beta.reshape(Cout, 1).astype(jnp.float32) - mean * scale
    ss = jnp.concatenate([scale, shift], axis=1)    # (Cout, 2)

    # ---- pass 2: conv + affine + ReLU, lane-dense NCHW output ----
    out3 = pl.pallas_call(
        apply_kernel,
        grid=(ng, n_t),
        in_specs=[
            pl.BlockSpec((nb, Cin, t_hw), lambda n, t: (n, 0, t)),
            pl.BlockSpec((Cout, Cin), lambda n, t: (0, 0)),
            pl.BlockSpec((Cout, 2), lambda n, t: (0, 0)),
        ],
        out_specs=pl.BlockSpec((nb, Cout, t_hw), lambda n, t: (n, 0, t)),
        out_shape=jax.ShapeDtypeStruct((N, Cout, hw_pad), x_nchw.dtype),
        compiler_params=pltpu.CompilerParams(
            dimension_semantics=("parallel", "parallel"),
            vmem_limit_bytes=_VMEM_LIMIT,
        ),
    )(x3, w, ss)

    if hw_pad != HW:
        out3 = out3[:, :, :HW]
    return out3.reshape(N, Cout, H, W)


def conv_bn_relu_ref(x_nchw, weight, gamma, beta, eps=EPS):
    """Pure-JAX reference (PyTorch training-mode forward semantics)."""
    N, Cin, H, W = x_nchw.shape
    Cout = weight.shape[0]
    w = weight.reshape(Cout, Cin)
    y = jnp.einsum("oc,nchw->nohw", w, x_nchw)
    mean = y.mean(axis=(0, 2, 3), keepdims=True)
    var = ((y - mean) ** 2).mean(axis=(0, 2, 3), keepdims=True)
    y = (y - mean) * jax.lax.rsqrt(var + eps)
    y = y * gamma.reshape(1, Cout, 1, 1) + beta.reshape(1, Cout, 1, 1)
    return jnp.maximum(y, 0.0)


if __name__ == "__main__":
    key = jax.random.PRNGKey(0)
    k_x, k_w, k_g, k_b = jax.random.split(key, 4)

    N, Cin, H, W = 2, 4, 16, 16
    Cout = 8

    x = jax.random.normal(k_x, (N, Cin, H, W), dtype=jnp.float32)
    weight = jax.random.normal(k_w, (Cout, Cin, 1, 1), dtype=jnp.float32) * 0.5
    gamma = 1.0 + 0.1 * jax.random.normal(k_g, (Cout,), dtype=jnp.float32)
    beta = 0.1 * jax.random.normal(k_b, (Cout,), dtype=jnp.float32)

    out = conv_bn_relu(x, weight, gamma, beta)
    jax.block_until_ready(out)
    ref = conv_bn_relu_ref(x, weight, gamma, beta)
    assert out.shape == (N, Cout, H, W)
    assert jnp.allclose(out, ref, atol=1e-4, rtol=1e-4)

    # second shape: exercises the non-128-divisible HW padding path
    H2, W2 = 10, 10
    x2 = jax.random.normal(k_x, (N, Cin, H2, W2), dtype=jnp.float32)
    out2 = conv_bn_relu(x2, weight, gamma, beta)
    jax.block_until_ready(out2)
    ref2 = conv_bn_relu_ref(x2, weight, gamma, beta)
    assert out2.shape == (N, Cout, H2, W2)
    assert jnp.allclose(out2, ref2, atol=1e-4, rtol=1e-4)

    print("KERNEL_OK")
</pallas_src>

<mosaic_0001>
module attributes {stable_mosaic.version = 11 : i64} {
  func.func @stats_kernel(%arg0: i32, %arg1: i32, %arg2: memref<2x4x256xf32, #tpu.memory_space<vmem>>, %arg3: memref<8x4xf32, #tpu.memory_space<vmem>>, %arg4: memref<1x8x1xf32, #tpu.memory_space<vmem>>, %arg5: memref<1x8x1xf32, #tpu.memory_space<vmem>>) attributes {dimension_semantics = [#tpu.dimension_semantics<parallel>, #tpu.dimension_semantics<arbitrary>], iteration_bounds = array<i64: 1, 1>, scalar_prefetch = 0 : i64, scratch_operands = 0 : i64, tpu.core_type = #tpu.core_type<tc>, window_params = [{transform_indices = @transform_0, window_bounds = array<i64: 2, 4, 256>}, {pipeline_mode = #tpu.pipeline_mode<synchronous>, transform_indices = @transform_1, window_bounds = array<i64: 8, 4>}, {transform_indices = @transform_2, window_bounds = array<i64: 1, 8, 1>}, {transform_indices = @transform_3, window_bounds = array<i64: 1, 8, 1>}]} {
    %c0_i32 = arith.constant 0 : i32
    %0 = arith.cmpi eq, %arg1, %c0_i32 : i32
    %1 = arith.extui %0 : i1 to i32
    %c0_i32_0 = arith.constant 0 : i32
    %2 = arith.cmpi ne, %1, %c0_i32_0 : i32
    scf.if %2 {
      %cst_20 = arith.constant 0.000000e+00 : f32
      %47 = vector.broadcast %cst_20 : f32 to vector<1x8x1xf32>
      %c0_21 = arith.constant 0 : index
      %c0_22 = arith.constant 0 : index
      %c0_23 = arith.constant 0 : index
      %48 = vector.load %arg4[%c0_21, %c0_22, %c0_23] : memref<1x8x1xf32, #tpu.memory_space<vmem>>, vector<1x8x1xf32>
      tpu.vector_store %arg4[%c0_21, %c0_22, %c0_23], %47 {strides = array<i32>} : memref<1x8x1xf32, #tpu.memory_space<vmem>>, vector<1x8x1xf32>,
      %cst_24 = arith.constant 0.000000e+00 : f32
      %49 = vector.broadcast %cst_24 : f32 to vector<1x8x1xf32>
      %c0_25 = arith.constant 0 : index
      %c0_26 = arith.constant 0 : index
      %c0_27 = arith.constant 0 : index
      %50 = vector.load %arg5[%c0_25, %c0_26, %c0_27] : memref<1x8x1xf32, #tpu.memory_space<vmem>>, vector<1x8x1xf32>
      tpu.vector_store %arg5[%c0_25, %c0_26, %c0_27], %49 {strides = array<i32>} : memref<1x8x1xf32, #tpu.memory_space<vmem>>, vector<1x8x1xf32>,
    } else {
    }
    %c0 = arith.constant 0 : index
    %c0_1 = arith.constant 0 : index
    %c0_2 = arith.constant 0 : index
    %3 = vector.load %arg2[%c0, %c0_1, %c0_2] : memref<2x4x256xf32, #tpu.memory_space<vmem>>, vector<2x4x256xf32>
    %c0_3 = arith.constant 0 : index
    %c0_4 = arith.constant 0 : index
    %4 = vector.load %arg3[%c0_3, %c0_4] : memref<8x4xf32, #tpu.memory_space<vmem>>, vector<8x4xf32>
    %5 = vector.extract_strided_slice %4 {offsets = [0, 0], sizes = [8, 1], strides = [1, 1]} : vector<8x4xf32> to vector<8x1xf32>
    %6 = vector.shape_cast %5 : vector<8x1xf32> to vector<1x8x1xf32>
    %7 = vector.extract_strided_slice %3 {offsets = [0, 0, 0], sizes = [2, 1, 256], strides = [1, 1, 1]} : vector<2x4x256xf32> to vector<2x1x256xf32>
    %8 = vector.broadcast %6 : vector<1x8x1xf32> to vector<2x8x256xf32>
    %9 = vector.broadcast %7 : vector<2x1x256xf32> to vector<2x8x256xf32>
    %10 = arith.mulf %8, %9 : vector<2x8x256xf32>
    %11 = vector.extract_strided_slice %4 {offsets = [0, 1], sizes = [8, 1], strides = [1, 1]} : vector<8x4xf32> to vector<8x1xf32>
    %12 = vector.shape_cast %11 : vector<8x1xf32> to vector<1x8x1xf32>
    %13 = vector.extract_strided_slice %3 {offsets = [0, 1, 0], sizes = [2, 1, 256], strides = [1, 1, 1]} : vector<2x4x256xf32> to vector<2x1x256xf32>
    %14 = vector.broadcast %12 : vector<1x8x1xf32> to vector<2x8x256xf32>
    %15 = vector.broadcast %13 : vector<2x1x256xf32> to vector<2x8x256xf32>
    %16 = arith.mulf %14, %15 : vector<2x8x256xf32>
    %17 = arith.addf %10, %16 : vector<2x8x256xf32>
    %18 = vector.extract_strided_slice %4 {offsets = [0, 2], sizes = [8, 1], strides = [1, 1]} : vector<8x4xf32> to vector<8x1xf32>
    %19 = vector.shape_cast %18 : vector<8x1xf32> to vector<1x8x1xf32>
    %20 = vector.extract_strided_slice %3 {offsets = [0, 2, 0], sizes = [2, 1, 256], strides = [1, 1, 1]} : vector<2x4x256xf32> to vector<2x1x256xf32>
    %21 = vector.broadcast %19 : vector<1x8x1xf32> to vector<2x8x256xf32>
    %22 = vector.broadcast %20 : vector<2x1x256xf32> to vector<2x8x256xf32>
    %23 = arith.mulf %21, %22 : vector<2x8x256xf32>
    %24 = arith.addf %17, %23 : vector<2x8x256xf32>
    %25 = vector.extract_strided_slice %4 {offsets = [0, 3], sizes = [8, 1], strides = [1, 1]} : vector<8x4xf32> to vector<8x1xf32>
    %26 = vector.shape_cast %25 : vector<8x1xf32> to vector<1x8x1xf32>
    %27 = vector.extract_strided_slice %3 {offsets = [0, 3, 0], sizes = [2, 1, 256], strides = [1, 1, 1]} : vector<2x4x256xf32> to vector<2x1x256xf32>
    %28 = vector.broadcast %26 : vector<1x8x1xf32> to vector<2x8x256xf32>
    %29 = vector.broadcast %27 : vector<2x1x256xf32> to vector<2x8x256xf32>
    %30 = arith.mulf %28, %29 : vector<2x8x256xf32>
    %31 = arith.addf %24, %30 : vector<2x8x256xf32>
    %c0_5 = arith.constant 0 : index
    %c0_6 = arith.constant 0 : index
    %c0_7 = arith.constant 0 : index
    %32 = vector.load %arg4[%c0_5, %c0_6, %c0_7] : memref<1x8x1xf32, #tpu.memory_space<vmem>>, vector<1x8x1xf32>
    %cst = arith.constant dense<0.000000e+00> : vector<2x8xf32>
    %33 = vector.multi_reduction <add>, %31, %cst [2] : vector<2x8x256xf32> to vector<2x8xf32>
    %34 = vector.shape_cast %33 : vector<2x8xf32> to vector<2x8x1xf32>
    %cst_8 = arith.constant dense<0.000000e+00> : vector<8x1xf32>
    %35 = vector.multi_reduction <add>, %34, %cst_8 [0] : vector<2x8x1xf32> to vector<8x1xf32>
    %36 = vector.shape_cast %35 : vector<8x1xf32> to vector<1x8x1xf32>
    %37 = arith.addf %32, %36 : vector<1x8x1xf32>
    %c0_9 = arith.constant 0 : index
    %c0_10 = arith.constant 0 : index
    %c0_11 = arith.constant 0 : index
    %38 = vector.load %arg4[%c0_9, %c0_10, %c0_11] : memref<1x8x1xf32, #tpu.memory_space<vmem>>, vector<1x8x1xf32>
    tpu.vector_store %arg4[%c0_9, %c0_10, %c0_11], %37 {strides = array<i32>} : memref<1x8x1xf32, #tpu.memory_space<vmem>>, vector<1x8x1xf32>,
    %c0_12 = arith.constant 0 : index
    %c0_13 = arith.constant 0 : index
    %c0_14 = arith.constant 0 : index
    %39 = vector.load %arg5[%c0_12, %c0_13, %c0_14] : memref<1x8x1xf32, #tpu.memory_space<vmem>>, vector<1x8x1xf32>
    %40 = arith.mulf %31, %31 : vector<2x8x256xf32>
    %cst_15 = arith.constant dense<0.000000e+00> : vector<2x8xf32>
    %41 = vector.multi_reduction <add>, %40, %cst_15 [2] : vector<2x8x256xf32> to vector<2x8xf32>
    %42 = vector.shape_cast %41 : vector<2x8xf32> to vector<2x8x1xf32>
    %cst_16 = arith.constant dense<0.000000e+00> : vector<8x1xf32>
    %43 = vector.multi_reduction <add>, %42, %cst_16 [0] : vector<2x8x1xf32> to vector<8x1xf32>
    %44 = vector.shape_cast %43 : vector<8x1xf32> to vector<1x8x1xf32>
    %45 = arith.addf %39, %44 : vector<1x8x1xf32>
    %c0_17 = arith.constant 0 : index
    %c0_18 = arith.constant 0 : index
    %c0_19 = arith.constant 0 : index
    %46 = vector.load %arg5[%c0_17, %c0_18, %c0_19] : memref<1x8x1xf32, #tpu.memory_space<vmem>>, vector<1x8x1xf32>
    tpu.vector_store %arg5[%c0_17, %c0_18, %c0_19], %45 {strides = array<i32>} : memref<1x8x1xf32, #tpu.memory_space<vmem>>, vector<1x8x1xf32>,
    return
  }
  func.func @transform_0(%arg0: i32, %arg1: i32) -> (i32, i32, i32) {
    %c0_i32 = arith.constant 0 : i32
    %c0_i32_0 = arith.constant 0 : i32
    return %arg0, %c0_i32, %arg1 : i32, i32, i32
  }
  func.func @transform_1(%arg0: i32, %arg1: i32) -> (i32, i32) {
    %c0_i32 = arith.constant 0 : i32
    %c0_i32_0 = arith.constant 0 : i32
    %c0_i32_1 = arith.constant 0 : i32
    return %c0_i32, %c0_i32_0 : i32, i32
  }
  func.func @transform_2(%arg0: i32, %arg1: i32) -> (i32, i32, i32) {
    %c0_i32 = arith.constant 0 : i32
    %c0_i32_0 = arith.constant 0 : i32
    %c0_i32_1 = arith.constant 0 : i32
    return %arg0, %c0_i32, %c0_i32_0 : i32, i32, i32
  }
  func.func @transform_3(%arg0: i32, %arg1: i32) -> (i32, i32, i32) {
    %c0_i32 = arith.constant 0 : i32
    %c0_i32_0 = arith.constant 0 : i32
    %c0_i32_1 = arith.constant 0 : i32
    return %arg0, %c0_i32, %c0_i32_0 : i32, i32, i32
  }
}

</mosaic_0001>

<llo_original>
// kernel: tpu_custom_call.1
$region0: #{tpu_custom_call.1}
  #allocation0 [shape = 'u32[]', space=smem, size = 0x4, offset = 0x4, fixed_abs, tag = 'smem constant byte address 0x4 - core index']
  #allocation1 [shape = 'u32[72,128]{1,0:T(1,128)}', space=vmem, size = 0x9000, scoped, tag = 'internal scratch']
  %s0 = inlined_call_operand.hbm [shape: f32[2,4,256], index: 0, kind: input, shape index: {}]
  %s1 = inlined_call_operand.vmem [shape: f32[8,4], index: 1, kind: input, shape index: {}]
  %s2 = inlined_call_operand.vmem [shape: f32[1,8,1], index: 2, kind: output, shape index: {0}]
  %s3 = inlined_call_operand.vmem [shape: f32[1,8,1], index: 3, kind: output, shape index: {1}]
  %4 = xla_tuple %s2, %s3
  %s5 = sld [smem:[#allocation0]]
  $region34: #{tpu_custom_call.1} parent=0
    _
  %s7 = ssub.s32 1, %s5
  %s8 = scalar_select 0, %s7, %s5
  $region1: #{tpu_custom_call.1} parent=0
    #allocation2 [shape = 'u8[8192]{0}', space=vmem, size = 0x2000, scoped, tag = 'input window, operand 0, single buffered']
    #allocation3 [shape = 's32[1]{0}', space=sflag, size = 0x4, scoped, tag = 'scoped memory for tpu_custom_call.1']
    %9 = vsyncpa [#allocation3], 0
    // Predicated region
    $region2: #{tpu_custom_call.1} parent=1 // pred_check
      _
    $region3: #{tpu_custom_call.1} parent=1 // pred_check_branch
      %11 = sbr.rel (0) target = $region5
    $region4: #{tpu_custom_call.1} parent=1 // pred_region
      %13 = vsyncadd [#allocation3], 0
      %s14 = sshll.u32 %s0, 4
      %s15 = int_to_ptr.hbm [resolvable:$true] %s14
      %s16 = sshll.u32 [#allocation2], 4
      %s17 = int_to_ptr.vmem [resolvable:$true] %s16
      %22 = dma.hbm_to_vmem [thread:$0]  %s15, 256, %s17, [#allocation3], 128, 128, 8
    $region5: #{tpu_custom_call.1} parent=1 // pred_fallthru
      _
    // Predicated region
    $region6: #{tpu_custom_call.1} parent=1 // pred_check
      _
    $region7: #{tpu_custom_call.1} parent=1 // pred_check_branch
      %24 = sbr.rel (0) target = $region9
    $region8: #{tpu_custom_call.1} parent=1 // pred_region
      _
    $region9: #{tpu_custom_call.1} parent=1 // pred_fallthru
      _
    // Predicated region
    $region10: #{tpu_custom_call.1} parent=1 // pred_check
      _
    $region11: #{tpu_custom_call.1} parent=1 // pred_check_branch
      %26 = sbr.rel (0) target = $region13
    $region12: #{tpu_custom_call.1} parent=1 // pred_region
      %28 = dma.done [#allocation3], 256
    $region13: #{tpu_custom_call.1} parent=1 // pred_fallthru
      _
    %p29 = scmp.eq.s32.totalorder 0, 0
    // Predicated region
    $region14: #{tpu_custom_call.1} parent=1 // pred_check
      %p30 = pneg %p29
    $region15: #{tpu_custom_call.1} parent=1 // pred_check_branch
      %32 = sbr.rel (%p30) target = $region17
    $region16: #{tpu_custom_call.1} parent=1 // pred_region
      %vm33 = vcmask 7168
      %34 = vst.msk [vmem:[%s2] sm:$0xff] %vm33, 0.0
      %35 = vst.msk [vmem:[%s3] sm:$0xff] %vm33, 0.0
    $region17: #{tpu_custom_call.1} parent=1 // pred_fallthru
      _
    %v36 = vld [vmem:[#allocation2] sm:$0xff]
    %v37 = vld [vmem:[#allocation2 + $0x8] sm:$0xff]
    %v38 = vld [vmem:[%s1] sm:$0xff]
    %40 = vset.pattern.permute.xlu0 0
    %41 = vperm.xlu0 %40, %v38
    %v42 = vpop.permute.xlu0 %41
    %v46 = vperm.slane %v36, 0
    %v47 = vperm.slane %v36, 4
    %v48 = vperm.slane %v37, 0
    %v49 = vperm.slane %v37, 4
    %v54 = vperm.slane %v46, 0
    %v55 = vperm.slane %v47, 0
    %v56 = vperm.slane %v48, 0
    %v57 = vperm.slane %v49, 0
    %v58 = vmul.f32 %v42, %v54
    %v59 = vmul.f32 %v42, %v55
    %v60 = vmul.f32 %v42, %v56
    %v61 = vmul.f32 %v42, %v57
    %62 = vset.pattern.permute.xlu0 1
    %63 = vperm.xlu0 %62, %v38
    %v64 = vpop.permute.xlu0 %63
    %v66 = vperm.slane %v36, 1
    %v67 = vperm.slane %v36, 5
    %v68 = vperm.slane %v37, 1
    %v69 = vperm.slane %v37, 5
    %v74 = vperm.slane %v66, 1
    %v75 = vperm.slane %v67, 1
    %v76 = vperm.slane %v68, 1
    %v77 = vperm.slane %v69, 1
    %v78 = vmul.f32 %v64, %v74
    %v79 = vmul.f32 %v64, %v75
    %v80 = vmul.f32 %v64, %v76
    %v81 = vmul.f32 %v64, %v77
    %v82 = vadd.f32 %v58, %v78
    %v83 = vadd.f32 %v59, %v79
    %v84 = vadd.f32 %v60, %v80
    %v85 = vadd.f32 %v61, %v81
    %86 = vset.pattern.permute.xlu0 2
    %87 = vperm.xlu0 %86, %v38
    %v88 = vpop.permute.xlu0 %87
    %v90 = vperm.slane %v36, 2
    %v91 = vperm.slane %v36, 6
    %v92 = vperm.slane %v37, 2
    %v93 = vperm.slane %v37, 6
    %v98 = vperm.slane %v90, 2
    %v99 = vperm.slane %v91, 2
    %v100 = vperm.slane %v92, 2
    %v101 = vperm.slane %v93, 2
    %v102 = vmul.f32 %v88, %v98
    %v103 = vmul.f32 %v88, %v99
    %v104 = vmul.f32 %v88, %v100
    %v105 = vmul.f32 %v88, %v101
    %v106 = vadd.f32 %v82, %v102
    %v107 = vadd.f32 %v83, %v103
    %v108 = vadd.f32 %v84, %v104
    %v109 = vadd.f32 %v85, %v105
    %110 = vset.pattern.permute.xlu0 3
    %111 = vperm.xlu0 %110, %v38
    %v112 = vpop.permute.xlu0 %111
    %v114 = vperm.slane %v36, 3
    %v115 = vperm.slane %v36, 7
    %v116 = vperm.slane %v37, 3
    %v117 = vperm.slane %v37, 7
    %v122 = vperm.slane %v114, 3
    %v123 = vperm.slane %v115, 3
    %v124 = vperm.slane %v116, 3
    %v125 = vperm.slane %v117, 3
    %v126 = vmul.f32 %v112, %v122
    %v127 = vmul.f32 %v112, %v123
    %v128 = vmul.f32 %v112, %v124
    %v129 = vmul.f32 %v112, %v125
    %v130 = vadd.f32 %v106, %v126
    %v131 = vadd.f32 %v107, %v127
    %v132 = vadd.f32 %v108, %v128
    %v133 = vadd.f32 %v109, %v129
    %v134 = vld [vmem:[%s2] sm:$0xff]
    %v135 = vadd.f32 %v130, %v131
    %136 = vadd.xlane.f32.xlu0 %v135
    %v137 = vpop.xlane.xlu0 %136
    %v138 = vadd.f32 %v132, %v133
    %139 = vadd.xlane.f32.xlu0 %v138
    %v140 = vpop.xlane.xlu0 %139
    %v141 = vadd.f32 %v137, %v140
    %v142 = vadd.f32 %v134, %v141
    %vm143 = vcmask 7168
    %144 = vst.msk [vmem:[%s2] sm:$0xff] %vm143, %v142
    %v145 = vld [vmem:[%s3] sm:$0xff]
    %v146 = vmul.f32 %v130, %v130
    %v147 = vmul.f32 %v131, %v131
    %v148 = vmul.f32 %v132, %v132
    %v149 = vmul.f32 %v133, %v133
    %v150 = vadd.f32 %v146, %v147
    %151 = vadd.xlane.f32.xlu0 %v150
    %v152 = vpop.xlane.xlu0 %151
    %v153 = vadd.f32 %v148, %v149
    %154 = vadd.xlane.f32.xlu0 %v153
    %v155 = vpop.xlane.xlu0 %154
    %v156 = vadd.f32 %v152, %v155
    %v157 = vadd.f32 %v145, %v156
    %158 = vst.msk [vmem:[%s3] sm:$0xff] %vm143, %v157
    // Predicated region
    $region18: #{tpu_custom_call.1} parent=1 // pred_check
      _
    $region19: #{tpu_custom_call.1} parent=1 // pred_check_branch
      %160 = sbr.rel (0) target = $region21
    $region20: #{tpu_custom_call.1} parent=1 // pred_region
      _
    $region21: #{tpu_custom_call.1} parent=1 // pred_fallthru
      _
    // Predicated region
    $region22: #{tpu_custom_call.1} parent=1 // pred_check
      _
    $region23: #{tpu_custom_call.1} parent=1 // pred_check_branch
      %162 = sbr.rel (0) target = $region25
    $region24: #{tpu_custom_call.1} parent=1 // pred_region
      _
    $region25: #{tpu_custom_call.1} parent=1 // pred_fallthru
      _
    // Predicated region
    $region26: #{tpu_custom_call.1} parent=1 // pred_check
      _
    $region27: #{tpu_custom_call.1} parent=1 // pred_check_branch
      %164 = sbr.rel (0) target = $region29
    $region28: #{tpu_custom_call.1} parent=1 // pred_region
      _
    $region29: #{tpu_custom_call.1} parent=1 // pred_fallthru
      _
    // Predicated region
    $region30: #{tpu_custom_call.1} parent=1 // pred_check
      _
    $region31: #{tpu_custom_call.1} parent=1 // pred_check_branch
      %166 = sbr.rel (0) target = $region33
    $region32: #{tpu_custom_call.1} parent=1 // pred_region
      _
    $region33: #{tpu_custom_call.1} parent=1 // pred_fallthru
      _
    %167 = vsyncpa [#allocation3], 1

</llo_original>
